<compile_context>
chip_gen: v7x
topology: tpu7x:2x2x1
jax: 0.10.0
libtpu: 0.0.40
codegen_flags: <defaults>
</compile_context>

<pallas_src>
import functools

import jax
import jax.numpy as jnp
from jax.experimental import pallas as pl
from jax.experimental.pallas import tpu as pltpu


# ----------------------------------------------------------------------------
# Pallas kernel: the classification head hot path (one batch tile per step)
#   out = softmax(relu(x @ W1 + b1) @ W2 + b2, axis=-1)   (class dim padded)
# ----------------------------------------------------------------------------
def _head_kernel(x_ref, w1_ref, b1_ref, w2_ref, b2_ref, probs_ref):
    # x arrives straight from HBM in its native dtype; cast to bf16 on the
    # VMEM tile (avoids a separate wrapper-side cast pass over x in HBM).
    x = x_ref[...].astype(jnp.bfloat16)                        # [TB, H]

    # dense1 + ReLU (MXU bf16, f32 accumulate)
    h = jnp.dot(x, w1_ref[...], preferred_element_type=jnp.float32)
    h = jnp.maximum(h + b1_ref[...], 0.0)                      # [TB, 512] f32

    # dense2 (MXU bf16, f32 accumulate) onto the lane-dense padded class dim
    logits = jnp.dot(h.astype(w2_ref.dtype), w2_ref[...],
                     preferred_element_type=jnp.float32)
    logits = logits + b2_ref[...]                              # [TB, 128] f32

    # softmax along last dim; padded lanes carry a -1e30 bias -> exp == 0.
    m = jnp.max(logits, axis=-1, keepdims=True)
    e = jnp.exp(logits - m)
    denom = jnp.sum(e, axis=-1, keepdims=True)
    # Full-precision reciprocal: the EUP approximation (~bf16 accurate) left
    # rows normalized only to ~1e-2; one exact per-row reciprocal is free
    # relative to the matmuls and keeps sum(probs) == 1 to f32 precision.
    inv = pl.reciprocal(denom, approx=False)
    probs_ref[...] = (e * inv).astype(probs_ref.dtype)


# ----------------------------------------------------------------------------
# Tiling helpers
# ----------------------------------------------------------------------------
def _round_up(n, m):
    return ((n + m - 1) // m) * m


def _choose_tile_b(batch, requested):
    """Batch tile: multiple of 16 (bf16 sublane packing, unmasked stores),
    capped at ceil(batch/2) so large batches give a grid of >= 2 steps (both
    v7x TensorCores get work), and never larger than the padded batch."""
    half = _round_up(max(1, -(-batch // 2)), 16)
    tb = min(_round_up(max(16, requested), 16), half)
    return min(tb, _round_up(batch, 16))


def _resident_spec(shape, index_map):
    """BlockSpec for operands whose index_map is constant across the grid.

    Single-buffer them (pipeline_mode=pl.Buffered(1)): the default double
    buffering allocates a second copy of the weights that is never re-DMA'd.
    Falls back to a plain spec if this JAX version lacks the kwarg."""
    try:
        return pl.BlockSpec(shape, index_map, pipeline_mode=pl.Buffered(1))
    except (AttributeError, TypeError):
        return pl.BlockSpec(shape, index_map)


# ----------------------------------------------------------------------------
# Wrapper around pallas_call
# ----------------------------------------------------------------------------
@functools.partial(jax.jit, static_argnames=("tile_b",))
def seq2seq_head_pallas(pooler_output, w1, b1, w2, b2, *, tile_b=1024):
    """softmax(relu(x @ w1 + b1) @ w2 + b2).

    Shapes: x [B,H], w1 [H,D], b1 [D], w2 [D,C], b2 [C]  (D=512, C=17).
    """
    B, H = pooler_output.shape
    d_mid = w1.shape[1]
    n_cls = w2.shape[1]
    # Keep the class pad at exactly 128 for C <= 128 (lane-dense, no extra
    # FLOPs); padded b2 lanes get -1e30 so their exp underflows to 0.
    n_cls_pad = max(128, _round_up(n_cls, 128))

    tb = _choose_tile_b(B, tile_b)
    b_pad = pl.cdiv(B, tb) * tb
    grid = (b_pad // tb,)

    # -- operand prep ---------------------------------------------------------
    x = pooler_output                       # native dtype; kernel casts to bf16
    if b_pad != B:
        x = jnp.pad(x, ((0, b_pad - B), (0, 0)))
    w1b = w1.astype(jnp.bfloat16)
    w2b = jnp.pad(w2.astype(jnp.bfloat16), ((0, 0), (0, n_cls_pad - n_cls)))
    b1f = b1.reshape(1, -1).astype(jnp.float32)
    b2f = jnp.pad(b2.reshape(1, -1).astype(jnp.float32),
                  ((0, 0), (0, n_cls_pad - n_cls)),
                  constant_values=jnp.float32(-1e30))

    flops = 2 * b_pad * (H * d_mid + d_mid * n_cls_pad)
    bytes_accessed = (x.size * x.dtype.itemsize + w1b.size * 2 + w2b.size * 2
                      + b1f.size * 4 + b2f.size * 4 + b_pad * n_cls_pad * 4)

    probs_padded = pl.pallas_call(
        _head_kernel,
        out_shape=jax.ShapeDtypeStruct((b_pad, n_cls_pad), jnp.float32),
        grid_spec=pltpu.PrefetchScalarGridSpec(
            num_scalar_prefetch=0,
            grid=grid,
            in_specs=[
                pl.BlockSpec((tb, H), lambda i: (i, 0)),              # x (streamed)
                _resident_spec((H, d_mid), lambda i: (0, 0)),         # w1 (resident)
                _resident_spec((1, d_mid), lambda i: (0, 0)),         # b1
                _resident_spec((d_mid, n_cls_pad), lambda i: (0, 0)),  # w2
                _resident_spec((1, n_cls_pad), lambda i: (0, 0)),     # b2
            ],
            out_specs=pl.BlockSpec((tb, n_cls_pad), lambda i: (i, 0)),
        ),
        compiler_params=pltpu.CompilerParams(
            dimension_semantics=("parallel",),
            # Big enough for tb~2048 even on v5e's 16 MiB default scoped VMEM,
            # still below v7x's 64 MiB physical VMEM.
            vmem_limit_bytes=48 * 1024 * 1024,
        ),
        cost_estimate=pl.CostEstimate(
            flops=flops,
            transcendentals=b_pad * n_cls_pad,
            bytes_accessed=bytes_accessed,
        ),
    )(x, w1b, b1f, w2b, b2f)

    return probs_padded[:B, :n_cls]


# ----------------------------------------------------------------------------
# Full forward matching the PyTorch module semantics (glue in plain JAX)
# ----------------------------------------------------------------------------
def seq2seq_forward(pooler_output, params, source_labels=None):
    probs = seq2seq_head_pallas(
        pooler_output, params["w1"], params["b1"], params["w2"], params["b2"]
    )
    if source_labels is not None:
        # PyTorch CrossEntropyLoss applied to the *softmax output* (as in the
        # reference module): it re-applies log_softmax to its input.
        logp = jax.nn.log_softmax(probs, axis=-1)
        nll = -jnp.take_along_axis(logp, source_labels[:, None], axis=-1)[:, 0]
        loss = jnp.mean(nll)
        return probs, loss
    else:
        # torch.argmax(out) with no dim -> flat argmax over the whole tensor.
        return jnp.argmax(probs)


# ----------------------------------------------------------------------------
# Deterministic parameter init + pure-JAX reference + demo
# ----------------------------------------------------------------------------
def init_params(key, hidden_size, d_mid=512, n_cls=17):
    k1, k2, k3, k4 = jax.random.split(key, 4)
    scale1 = 1.0 / jnp.sqrt(hidden_size)
    scale2 = 1.0 / jnp.sqrt(d_mid)
    return {
        "w1": jax.random.uniform(k1, (hidden_size, d_mid), jnp.float32, -scale1, scale1),
        "b1": jax.random.uniform(k2, (d_mid,), jnp.float32, -scale1, scale1),
        "w2": jax.random.uniform(k3, (d_mid, n_cls), jnp.float32, -scale2, scale2),
        "b2": jax.random.uniform(k4, (n_cls,), jnp.float32, -scale2, scale2),
    }


def _reference_head(x, p):
    h = jnp.maximum(x @ p["w1"] + p["b1"], 0.0)
    logits = h @ p["w2"] + p["b2"]
    return jax.nn.softmax(logits, axis=-1)


if __name__ == "__main__":
    H = 64  # small stand-in hidden size

    key = jax.random.PRNGKey(0)
    k_params, k_x, k_lbl, k_x2 = jax.random.split(key, 4)
    params = init_params(k_params, H)

    # ---- tiny batch (B=2): labels branch + no-labels branch -----------------
    B = 2
    # Stand-in for encoder(source_ids, attention_mask=source_mask)['pooler_output']
    pooler_output = jax.random.normal(k_x, (B, H), dtype=jnp.float32)
    labels = jax.random.randint(k_lbl, (B,), 0, 17)

    probs, loss = seq2seq_forward(pooler_output, params, source_labels=labels)
    jax.block_until_ready(probs)
    jax.block_until_ready(loss)

    pred = seq2seq_forward(pooler_output, params, source_labels=None)
    jax.block_until_ready(pred)

    ref = _reference_head(pooler_output, params)
    assert probs.shape == (B, 17)
    assert jnp.allclose(probs, ref, atol=2e-2, rtol=0.0), "mismatch vs reference"
    assert jnp.allclose(jnp.sum(probs, axis=-1), 1.0, atol=1e-3), "softmax not normalized"
    assert bool(jnp.isfinite(loss))
    assert pred.shape == ()

    # ---- batch that exercises a multi-step grid + row padding ----------------
    B2 = 40
    x2 = jax.random.normal(k_x2, (B2, H), dtype=jnp.float32)
    probs2 = seq2seq_head_pallas(
        x2, params["w1"], params["b1"], params["w2"], params["b2"], tile_b=32
    )
    jax.block_until_ready(probs2)
    ref2 = _reference_head(x2, params)
    assert probs2.shape == (B2, 17)
    assert jnp.allclose(probs2, ref2, atol=2e-2, rtol=0.0), "mismatch vs reference (B=40)"
    assert jnp.allclose(jnp.sum(probs2, axis=-1), 1.0, atol=1e-3), "softmax not normalized (B=40)"

    print("KERNEL_OK")
</pallas_src>

<mosaic_0001>
module attributes {stable_mosaic.version = 11 : i64} {
  func.func @_head_kernel(%arg0: i32, %arg1: memref<16x64xf32, #tpu.memory_space<vmem>>, %arg2: memref<64x512xbf16, #tpu.memory_space<vmem>>, %arg3: memref<1x512xf32, #tpu.memory_space<vmem>>, %arg4: memref<512x128xbf16, #tpu.memory_space<vmem>>, %arg5: memref<1x128xf32, #tpu.memory_space<vmem>>, %arg6: memref<16x128xf32, #tpu.memory_space<vmem>>) attributes {dimension_semantics = [#tpu.dimension_semantics<parallel>], iteration_bounds = array<i64: 1>, scalar_prefetch = 0 : i64, scratch_operands = 0 : i64, tpu.core_type = #tpu.core_type<tc>, window_params = [{transform_indices = @transform_0, window_bounds = array<i64: 16, 64>}, {pipeline_mode = #tpu.pipeline_mode<synchronous>, transform_indices = @transform_1, window_bounds = array<i64: 64, 512>}, {pipeline_mode = #tpu.pipeline_mode<synchronous>, transform_indices = @transform_2, window_bounds = array<i64: 1, 512>}, {pipeline_mode = #tpu.pipeline_mode<synchronous>, transform_indices = @transform_3, window_bounds = array<i64: 512, 128>}, {pipeline_mode = #tpu.pipeline_mode<synchronous>, transform_indices = @transform_4, window_bounds = array<i64: 1, 128>}, {transform_indices = @transform_5, window_bounds = array<i64: 16, 128>}]} {
    %c0 = arith.constant 0 : index
    %c0_0 = arith.constant 0 : index
    %0 = vector.load %arg1[%c0, %c0_0] : memref<16x64xf32, #tpu.memory_space<vmem>>, vector<16x64xf32>
    %1 = arith.truncf %0 : vector<16x64xf32> to vector<16x64xbf16>
    %c0_1 = arith.constant 0 : index
    %c0_2 = arith.constant 0 : index
    %2 = vector.load %arg2[%c0_1, %c0_2] : memref<64x512xbf16, #tpu.memory_space<vmem>>, vector<64x512xbf16>
    %cst = arith.constant dense<0.000000e+00> : vector<16x512xf32>
    %3 = tpu.matmul %1, %2, %cst {dimension_numbers = #tpu.dot_dimension_numbers<[1], [0], [0], [1], [0, 0, 1, 1], [], []>} : vector<16x64xbf16>, vector<64x512xbf16>, vector<16x512xf32> -> vector<16x512xf32>
    %c0_3 = arith.constant 0 : index
    %c0_4 = arith.constant 0 : index
    %4 = vector.load %arg3[%c0_3, %c0_4] : memref<1x512xf32, #tpu.memory_space<vmem>>, vector<1x512xf32>
    %5 = vector.broadcast %4 : vector<1x512xf32> to vector<16x512xf32>
    %6 = arith.addf %3, %5 : vector<16x512xf32>
    %cst_5 = arith.constant 0.000000e+00 : f32
    %7 = vector.broadcast %cst_5 : f32 to vector<16x512xf32>
    %8 = arith.maximumf %6, %7 : vector<16x512xf32>
    %9 = arith.truncf %8 : vector<16x512xf32> to vector<16x512xbf16>
    %c0_6 = arith.constant 0 : index
    %c0_7 = arith.constant 0 : index
    %10 = vector.load %arg4[%c0_6, %c0_7] : memref<512x128xbf16, #tpu.memory_space<vmem>>, vector<512x128xbf16>
    %cst_8 = arith.constant dense<0.000000e+00> : vector<16x128xf32>
    %11 = tpu.matmul %9, %10, %cst_8 {dimension_numbers = #tpu.dot_dimension_numbers<[1], [0], [0], [1], [0, 0, 1, 1], [], []>} : vector<16x512xbf16>, vector<512x128xbf16>, vector<16x128xf32> -> vector<16x128xf32>
    %c0_9 = arith.constant 0 : index
    %c0_10 = arith.constant 0 : index
    %12 = vector.load %arg5[%c0_9, %c0_10] : memref<1x128xf32, #tpu.memory_space<vmem>>, vector<1x128xf32>
    %13 = vector.broadcast %12 : vector<1x128xf32> to vector<16x128xf32>
    %14 = arith.addf %11, %13 : vector<16x128xf32>
    %cst_11 = arith.constant dense<0xFF800000> : vector<16xf32>
    %15 = vector.multi_reduction <maximumf>, %14, %cst_11 [1] : vector<16x128xf32> to vector<16xf32>
    %16 = vector.shape_cast %15 : vector<16xf32> to vector<16x1xf32>
    %17 = vector.broadcast %16 : vector<16x1xf32> to vector<16x128xf32>
    %18 = arith.subf %14, %17 : vector<16x128xf32>
    %19 = math.exp %18 : vector<16x128xf32>
    %cst_12 = arith.constant dense<0.000000e+00> : vector<16xf32>
    %20 = vector.multi_reduction <add>, %19, %cst_12 [1] : vector<16x128xf32> to vector<16xf32>
    %21 = vector.shape_cast %20 : vector<16xf32> to vector<16x1xf32>
    %22 = tpu.reciprocal %21 : vector<16x1xf32> -> vector<16x1xf32>
    %23 = vector.broadcast %22 : vector<16x1xf32> to vector<16x128xf32>
    %24 = arith.mulf %19, %23 : vector<16x128xf32>
    %c0_13 = arith.constant 0 : index
    %c0_14 = arith.constant 0 : index
    %25 = vector.load %arg6[%c0_13, %c0_14] : memref<16x128xf32, #tpu.memory_space<vmem>>, vector<16x128xf32>
    tpu.vector_store %arg6[%c0_13, %c0_14], %24 {strides = array<i32>} : memref<16x128xf32, #tpu.memory_space<vmem>>, vector<16x128xf32>,
    return
  }
  func.func @transform_0(%arg0: i32) -> (i32, i32) {
    %c0_i32 = arith.constant 0 : i32
    %c0_i32_0 = arith.constant 0 : i32
    return %arg0, %c0_i32 : i32, i32
  }
  func.func @transform_1(%arg0: i32) -> (i32, i32) {
    %c0_i32 = arith.constant 0 : i32
    %c0_i32_0 = arith.constant 0 : i32
    %c0_i32_1 = arith.constant 0 : i32
    return %c0_i32, %c0_i32_0 : i32, i32
  }
  func.func @transform_2(%arg0: i32) -> (i32, i32) {
    %c0_i32 = arith.constant 0 : i32
    %c0_i32_0 = arith.constant 0 : i32
    %c0_i32_1 = arith.constant 0 : i32
    return %c0_i32, %c0_i32_0 : i32, i32
  }
  func.func @transform_3(%arg0: i32) -> (i32, i32) {
    %c0_i32 = arith.constant 0 : i32
    %c0_i32_0 = arith.constant 0 : i32
    %c0_i32_1 = arith.constant 0 : i32
    return %c0_i32, %c0_i32_0 : i32, i32
  }
  func.func @transform_4(%arg0: i32) -> (i32, i32) {
    %c0_i32 = arith.constant 0 : i32
    %c0_i32_0 = arith.constant 0 : i32
    %c0_i32_1 = arith.constant 0 : i32
    return %c0_i32, %c0_i32_0 : i32, i32
  }
  func.func @transform_5(%arg0: i32) -> (i32, i32) {
    %c0_i32 = arith.constant 0 : i32
    %c0_i32_0 = arith.constant 0 : i32
    return %arg0, %c0_i32 : i32, i32
  }
}

</mosaic_0001>

<llo_original>
// kernel: seq2seq_head_pallas.1
$region0: #{seq2seq_head_pallas.1}
  #allocation0 [shape = 'u32[]', space=smem, size = 0x4, offset = 0x4, fixed_abs, tag = 'smem constant byte address 0x4 - core index']
  #allocation1 [shape = 'u32[144,128]{1,0:T(1,128)}', space=vmem, size = 0x12000, scoped, tag = 'internal scratch']
  %s0 = inlined_call_operand.vmem [shape: f32[16,64], index: 0, kind: input, shape index: {}]
  %s1 = inlined_call_operand.vmem [shape: bf16[64,512], index: 1, kind: input, shape index: {}]
  %s2 = inlined_call_operand.vmem [shape: f32[1,512], index: 2, kind: input, shape index: {}]
  %s3 = inlined_call_operand.vmem [shape: bf16[512,128], index: 3, kind: input, shape index: {}]
  %s4 = inlined_call_operand.vmem [shape: f32[1,128], index: 4, kind: input, shape index: {}]
  %s5 = inlined_call_operand.vmem [shape: f32[16,128], index: 5, kind: output, shape index: {}]
  %s6 = sld [smem:[#allocation0]]
  $region30: #{seq2seq_head_pallas.1} parent=0
    _
  %s8 = ssub.s32 1, %s6
  %s9 = scalar_select 0, %s8, %s6
  // Predicated region
  $region2: #{seq2seq_head_pallas.1} parent=0 // pred_check
    _
  $region3: #{seq2seq_head_pallas.1} parent=0 // pred_check_branch
    %11 = sbr.rel (0) target = $region5
  $region4: #{seq2seq_head_pallas.1} parent=0 // pred_region
    _
  $region5: #{seq2seq_head_pallas.1} parent=0 // pred_fallthru
    _
  // Predicated region
  $region6: #{seq2seq_head_pallas.1} parent=0 // pred_check
    _
  $region7: #{seq2seq_head_pallas.1} parent=0 // pred_check_branch
    %13 = sbr.rel (0) target = $region9
  $region8: #{seq2seq_head_pallas.1} parent=0 // pred_region
    _
  $region9: #{seq2seq_head_pallas.1} parent=0 // pred_fallthru
    _
  // Predicated region
  $region10: #{seq2seq_head_pallas.1} parent=0 // pred_check
    _
  $region11: #{seq2seq_head_pallas.1} parent=0 // pred_check_branch
    %15 = sbr.rel (0) target = $region13
  $region12: #{seq2seq_head_pallas.1} parent=0 // pred_region
    _
  $region13: #{seq2seq_head_pallas.1} parent=0 // pred_fallthru
    _
  // Predicated region
  $region14: #{seq2seq_head_pallas.1} parent=0 // pred_check
    _
  $region15: #{seq2seq_head_pallas.1} parent=0 // pred_check_branch
    %17 = sbr.rel (0) target = $region17
  $region16: #{seq2seq_head_pallas.1} parent=0 // pred_region
    _
  $region17: #{seq2seq_head_pallas.1} parent=0 // pred_fallthru
    _
  // Predicated region
  $region18: #{seq2seq_head_pallas.1} parent=0 // pred_check
    _
  $region19: #{seq2seq_head_pallas.1} parent=0 // pred_check_branch
    %19 = sbr.rel (0) target = $region21
  $region20: #{seq2seq_head_pallas.1} parent=0 // pred_region
    _
  $region21: #{seq2seq_head_pallas.1} parent=0 // pred_fallthru
    _
  %v21 = vld [vmem:[%s0] sm:$0xff]
  %v22 = vld [vmem:[%s0 + $0x8] sm:$0xff]
  %v23 = vpack.c.bf16 %v22, %v21
  %v24 = vld [vmem:[%s1] sm:$0xff]
  %v25 = vld [vmem:[%s1 + $0x8] sm:$0xff]
  %v26 = vld [vmem:[%s1 + $0x10] sm:$0xff]
  %v27 = vld [vmem:[%s1 + $0x18] sm:$0xff]
  %v28 = vld [vmem:[%s1 + $0x20] sm:$0xff]
  %v29 = vld [vmem:[%s1 + $0x28] sm:$0xff]
  %v30 = vld [vmem:[%s1 + $0x30] sm:$0xff]
  %v31 = vld [vmem:[%s1 + $0x38] sm:$0xff]
  %v32 = vld [vmem:[%s1 + $0x40] sm:$0xff]
  %v33 = vld [vmem:[%s1 + $0x48] sm:$0xff]
  %v34 = vld [vmem:[%s1 + $0x50] sm:$0xff]
  %v35 = vld [vmem:[%s1 + $0x58] sm:$0xff]
  %v36 = vld [vmem:[%s1 + $0x60] sm:$0xff]
  %v37 = vld [vmem:[%s1 + $0x68] sm:$0xff]
  %v38 = vld [vmem:[%s1 + $0x70] sm:$0xff]
  %v39 = vld [vmem:[%s1 + $0x78] sm:$0xff]
  %v40 = vld [vmem:[%s2] sm:$0xf]
  %v42 = vlaneseq
  %v43 = vshrl.u32 %v42, 7
  %v44 = vsub.s32 0, %v43
  %v45 = vrot.slane %v40, %v44
  %v46 = vlaneseq
  %v47 = vshrl.u32 %v46, 7
  %v48 = vsub.s32 1, %v47
  %v49 = vrot.slane %v40, %v48
  %v50 = vlaneseq
  %v51 = vshrl.u32 %v50, 7
  %v52 = vsub.s32 2, %v51
  %v53 = vrot.slane %v40, %v52
  %v54 = vlaneseq
  %v55 = vshrl.u32 %v54, 7
  %v56 = vsub.s32 3, %v55
  %v57 = vrot.slane %v40, %v56
  %v78 = vunpack.c.l.b16 %v24
  %v79 = vunpack.c.h.b16 %v24
  %v80 = vunpack.c.l.b16 %v25
  %v81 = vunpack.c.h.b16 %v25
  %v82 = vunpack.c.l.b16 %v26
  %v83 = vunpack.c.h.b16 %v26
  %v84 = vunpack.c.l.b16 %v27
  %v85 = vunpack.c.h.b16 %v27
  %v86 = vunpack.c.l.b16 %v28
  %v87 = vunpack.c.h.b16 %v28
  %v88 = vunpack.c.l.b16 %v29
  %v89 = vunpack.c.h.b16 %v29
  %v90 = vunpack.c.l.b16 %v30
  %v91 = vunpack.c.h.b16 %v30
  %v92 = vunpack.c.l.b16 %v31
  %v93 = vunpack.c.h.b16 %v31
  %v94 = vunpack.c.l.b16 %v32
  %v95 = vunpack.c.h.b16 %v32
  %v96 = vunpack.c.l.b16 %v33
  %v97 = vunpack.c.h.b16 %v33
  %v98 = vunpack.c.l.b16 %v34
  %v99 = vunpack.c.h.b16 %v34
  %v100 = vunpack.c.l.b16 %v35
  %v101 = vunpack.c.h.b16 %v35
  %v102 = vunpack.c.l.b16 %v36
  %v103 = vunpack.c.h.b16 %v36
  %v104 = vunpack.c.l.b16 %v37
  %v105 = vunpack.c.h.b16 %v37
  %v106 = vunpack.c.l.b16 %v38
  %v107 = vunpack.c.h.b16 %v38
  %v108 = vunpack.c.l.b16 %v39
  %v109 = vunpack.c.h.b16 %v39
  %v110 = vpack.c.b16 %v82, %v78
  %v111 = vpack.c.b16 %v83, %v79
  %v112 = vpack.c.b16 %v84, %v80
  %v113 = vpack.c.b16 %v85, %v81
  %v114 = vpack.c.b16 %v90, %v86
  %v115 = vpack.c.b16 %v91, %v87
  %v116 = vpack.c.b16 %v92, %v88
  %v117 = vpack.c.b16 %v93, %v89
  %v118 = vpack.c.b16 %v98, %v94
  %v119 = vpack.c.b16 %v99, %v95
  %v120 = vpack.c.b16 %v100, %v96
  %v121 = vpack.c.b16 %v101, %v97
  %v122 = vpack.c.b16 %v106, %v102
  %v123 = vpack.c.b16 %v107, %v103
  %v124 = vpack.c.b16 %v108, %v104
  %v125 = vpack.c.b16 %v109, %v105
  %vm142 = vcmask 523264
  %v144 = vsel %vm142, %v23, 0
  %146 = vmatprep.subr.bf16.mxu0 %v111
  %147 = vmatpush1.bf16.msra.mxu0 %v110
  %148 = vmatprep.subr.bf16.mxu0 %v115
  %149 = vmatpush1.bf16.msra.mxu0 %v114
  %150 = vmatprep.subr.bf16.mxu0 %v119
  %151 = vmatpush1.bf16.msra.mxu0 %v118
  %152 = vmatprep.subr.bf16.mxu0 %v123
  %153 = vmatpush1.bf16.msra.mxu0 %v122
  %154 = vmatprep.subr.bf16.mxu0 0
  %155 = vmatpush1.bf16.msra.mxu0 0
  %156 = vmatprep.subr.bf16.mxu0 0
  %157 = vmatpush1.bf16.msra.mxu0 0
  %158 = vmatprep.subr.bf16.mxu0 0
  %159 = vmatpush1.bf16.msra.mxu0 0
  %160 = vmatprep.subr.bf16.mxu0 0
  %161 = vmatpush1.bf16.msra.mxu0 0
  %162 = vmatprep.subr.bf16.mxu0 0
  %163 = vmatpush1.bf16.msra.mxu0 0
  %164 = vmatprep.subr.bf16.mxu0 0
  %165 = vmatpush1.bf16.msra.mxu0 0
  %166 = vmatprep.subr.bf16.mxu0 0
  %167 = vmatpush1.bf16.msra.mxu0 0
  %168 = vmatprep.subr.bf16.mxu0 0
  %169 = vmatpush1.bf16.msra.mxu0 0
  %170 = vmatprep.subr.bf16.mxu0 0
  %171 = vmatpush1.bf16.msra.mxu0 0
  %172 = vmatprep.subr.bf16.mxu0 0
  %173 = vmatpush1.bf16.msra.mxu0 0
  %174 = vmatprep.subr.bf16.mxu0 0
  %175 = vmatpush1.bf16.msra.mxu0 0
  %176 = vmatprep.subr.bf16.mxu0 0
  %177 = vmatpush1.bf16.msra.mxu0 0
  %178 = vmatprep.mubr.bf16.mxu0 0
  %179 = vmatmul.mubr.bf16.gmra.mrb[0].mxu0 %v144
  %v180 = vpop.f32.mrb[0].mxu0
  %v181 = vadd.f32 %v45, %v180
  %v182 = vpop.f32.mrb[0].mxu0
  %v183 = vadd.f32 %v49, %v182
  %v184 = vpop.f32.mrb[0].mxu0
  %v185 = vadd.f32 %v45, %v184
  %v186 = vpop.f32.mrb[0].mxu0
  %v187 = vadd.f32 %v49, %v186
  %188 = vdwg.mxu0
  %189 = vmatprep.subr.bf16.mxu0 %v113
  %190 = vmatpush1.bf16.msra.mxu0 %v112
  %191 = vmatprep.subr.bf16.mxu0 %v117
  %192 = vmatpush1.bf16.msra.mxu0 %v116
  %193 = vmatprep.subr.bf16.mxu0 %v121
  %194 = vmatpush1.bf16.msra.mxu0 %v120
  %195 = vmatprep.subr.bf16.mxu0 %v125
  %196 = vmatpush1.bf16.msra.mxu0 %v124
  %197 = vmatprep.subr.bf16.mxu0 0
  %198 = vmatpush1.bf16.msra.mxu0 0
  %199 = vmatprep.subr.bf16.mxu0 0
  %200 = vmatpush1.bf16.msra.mxu0 0
  %201 = vmatprep.subr.bf16.mxu0 0
  %202 = vmatpush1.bf16.msra.mxu0 0
  %203 = vmatprep.subr.bf16.mxu0 0
  %204 = vmatpush1.bf16.msra.mxu0 0
  %205 = vmatprep.subr.bf16.mxu0 0
  %206 = vmatpush1.bf16.msra.mxu0 0
  %207 = vmatprep.subr.bf16.mxu0 0
  %208 = vmatpush1.bf16.msra.mxu0 0
  %209 = vmatprep.subr.bf16.mxu0 0
  %210 = vmatpush1.bf16.msra.mxu0 0
  %211 = vmatprep.subr.bf16.mxu0 0
  %212 = vmatpush1.bf16.msra.mxu0 0
  %213 = vmatprep.subr.bf16.mxu0 0
  %214 = vmatpush1.bf16.msra.mxu0 0
  %215 = vmatprep.subr.bf16.mxu0 0
  %216 = vmatpush1.bf16.msra.mxu0 0
  %217 = vmatprep.subr.bf16.mxu0 0
  %218 = vmatpush1.bf16.msra.mxu0 0
  %219 = vmatprep.subr.bf16.mxu0 0
  %220 = vmatpush1.bf16.msra.mxu0 0
  %221 = vmatprep.mubr.bf16.mxu0 0
  %222 = vmatmul.mubr.bf16.gmra.mrb[0].mxu0 %v144
  %v223 = vpop.f32.mrb[0].mxu0
  %v224 = vadd.f32 %v53, %v223
  %v225 = vpop.f32.mrb[0].mxu0
  %v226 = vadd.f32 %v57, %v225
  %v227 = vpop.f32.mrb[0].mxu0
  %v228 = vadd.f32 %v53, %v227
  %v229 = vpop.f32.mrb[0].mxu0
  %v230 = vadd.f32 %v57, %v229
  %231 = vdwg.mxu0
  %v232 = vmax.f32 %v181, 0.0
  %v233 = vmax.f32 %v183, 0.0
  %v234 = vmax.f32 %v224, 0.0
  %v235 = vmax.f32 %v226, 0.0
  %v236 = vmax.f32 %v185, 0.0
  %v237 = vmax.f32 %v187, 0.0
  %v238 = vmax.f32 %v228, 0.0
  %v239 = vmax.f32 %v230, 0.0
  %v240 = vpack.c.bf16 %v236, %v232
  %v241 = vpack.c.bf16 %v237, %v233
  %v242 = vpack.c.bf16 %v238, %v234
  %v243 = vpack.c.bf16 %v239, %v235
  %v244 = vld [vmem:[%s3] sm:$0xf]
  %v245 = vld [vmem:[%s3 + $0x4] sm:$0xf]
  %v246 = vld [vmem:[%s3 + $0x8] sm:$0xf]
  %v247 = vld [vmem:[%s3 + $0xc] sm:$0xf]
  %v248 = vld [vmem:[%s3 + $0x10] sm:$0xf]
  %v249 = vld [vmem:[%s3 + $0x14] sm:$0xf]
  %v250 = vld [vmem:[%s3 + $0x18] sm:$0xf]
  %v251 = vld [vmem:[%s3 + $0x1c] sm:$0xf]
  %v252 = vld [vmem:[%s3 + $0x20] sm:$0xf]
  %v253 = vld [vmem:[%s3 + $0x24] sm:$0xf]
  %v254 = vld [vmem:[%s3 + $0x28] sm:$0xf]
  %v255 = vld [vmem:[%s3 + $0x2c] sm:$0xf]
  %v256 = vld [vmem:[%s3 + $0x30] sm:$0xf]
  %v257 = vld [vmem:[%s3 + $0x34] sm:$0xf]
  %v258 = vld [vmem:[%s3 + $0x38] sm:$0xf]
  %v259 = vld [vmem:[%s3 + $0x3c] sm:$0xf]
  %v260 = vld [vmem:[%s3 + $0x40] sm:$0xf]
  %v261 = vld [vmem:[%s3 + $0x44] sm:$0xf]
  %v262 = vld [vmem:[%s3 + $0x48] sm:$0xf]
  %v263 = vld [vmem:[%s3 + $0x4c] sm:$0xf]
  %v264 = vld [vmem:[%s3 + $0x50] sm:$0xf]
  %v265 = vld [vmem:[%s3 + $0x54] sm:$0xf]
  %v266 = vld [vmem:[%s3 + $0x58] sm:$0xf]
  %v267 = vld [vmem:[%s3 + $0x5c] sm:$0xf]
  %v268 = vld [vmem:[%s3 + $0x60] sm:$0xf]
  %v269 = vld [vmem:[%s3 + $0x64] sm:$0xf]
  %v270 = vld [vmem:[%s3 + $0x68] sm:$0xf]
  %v271 = vld [vmem:[%s3 + $0x6c] sm:$0xf]
  %v272 = vld [vmem:[%s3 + $0x70] sm:$0xf]
  %v273 = vld [vmem:[%s3 + $0x74] sm:$0xf]
  %v274 = vld [vmem:[%s3 + $0x78] sm:$0xf]
  %v275 = vld [vmem:[%s3 + $0x7c] sm:$0xf]
  %v276 = vld [vmem:[%s3 + $0x80] sm:$0xf]
  %v277 = vld [vmem:[%s3 + $0x84] sm:$0xf]
  %v278 = vld [vmem:[%s3 + $0x88] sm:$0xf]
  %v279 = vld [vmem:[%s3 + $0x8c] sm:$0xf]
  %v280 = vld [vmem:[%s3 + $0x90] sm:$0xf]
  %v281 = vld [vmem:[%s3 + $0x94] sm:$0xf]
  %v282 = vld [vmem:[%s3 + $0x98] sm:$0xf]
  %v283 = vld [vmem:[%s3 + $0x9c] sm:$0xf]
  %v284 = vld [vmem:[%s3 + $0xa0] sm:$0xf]
  %v285 = vld [vmem:[%s3 + $0xa4] sm:$0xf]
  %v286 = vld [vmem:[%s3 + $0xa8] sm:$0xf]
  %v287 = vld [vmem:[%s3 + $0xac] sm:$0xf]
  %v288 = vld [vmem:[%s3 + $0xb0] sm:$0xf]
  %v289 = vld [vmem:[%s3 + $0xb4] sm:$0xf]
  %v290 = vld [vmem:[%s3 + $0xb8] sm:$0xf]
  %v291 = vld [vmem:[%s3 + $0xbc] sm:$0xf]
  %v292 = vld [vmem:[%s3 + $0xc0] sm:$0xf]
  %v293 = vld [vmem:[%s3 + $0xc4] sm:$0xf]
  %v294 = vld [vmem:[%s3 + $0xc8] sm:$0xf]
  %v295 = vld [vmem:[%s3 + $0xcc] sm:$0xf]
  %v296 = vld [vmem:[%s3 + $0xd0] sm:$0xf]
  %v297 = vld [vmem:[%s3 + $0xd4] sm:$0xf]
  %v298 = vld [vmem:[%s3 + $0xd8] sm:$0xf]
  %v299 = vld [vmem:[%s3 + $0xdc] sm:$0xf]
  %v300 = vld [vmem:[%s3 + $0xe0] sm:$0xf]
  %v301 = vld [vmem:[%s3 + $0xe4] sm:$0xf]
  %v302 = vld [vmem:[%s3 + $0xe8] sm:$0xf]
  %v303 = vld [vmem:[%s3 + $0xec] sm:$0xf]
  %v304 = vld [vmem:[%s3 + $0xf0] sm:$0xf]
  %v305 = vld [vmem:[%s3 + $0xf4] sm:$0xf]
  %v306 = vld [vmem:[%s3 + $0xf8] sm:$0xf]
  %v307 = vld [vmem:[%s3 + $0xfc] sm:$0xf]
  %v308 = vld [vmem:[%s4] sm:$0x1]
  %v310 = vlaneseq
  %v311 = vshrl.u32 %v310, 7
  %v312 = vsub.s32 0, %v311
  %v313 = vrot.slane %v308, %v312
  %v379 = vunpack.c.l.b16 %v244
  %v380 = vunpack.c.l.b16 %v245
  %v381 = vunpack.c.l.b16 %v246
  %v382 = vunpack.c.l.b16 %v247
  %v383 = vunpack.c.l.b16 %v248
  %v384 = vunpack.c.l.b16 %v249
  %v385 = vunpack.c.l.b16 %v250
  %v386 = vunpack.c.l.b16 %v251
  %v387 = vunpack.c.l.b16 %v252
  %v388 = vunpack.c.l.b16 %v253
  %v389 = vunpack.c.l.b16 %v254
  %v390 = vunpack.c.l.b16 %v255
  %v391 = vunpack.c.l.b16 %v256
  %v392 = vunpack.c.l.b16 %v257
  %v393 = vunpack.c.l.b16 %v258
  %v394 = vunpack.c.l.b16 %v259
  %v395 = vunpack.c.l.b16 %v260
  %v396 = vunpack.c.l.b16 %v261
  %v397 = vunpack.c.l.b16 %v262
  %v398 = vunpack.c.l.b16 %v263
  %v399 = vunpack.c.l.b16 %v264
  %v400 = vunpack.c.l.b16 %v265
  %v401 = vunpack.c.l.b16 %v266
  %v402 = vunpack.c.l.b16 %v267
  %v403 = vunpack.c.l.b16 %v268
  %v404 = vunpack.c.l.b16 %v269
  %v405 = vunpack.c.l.b16 %v270
  %v406 = vunpack.c.l.b16 %v271
  %v407 = vunpack.c.l.b16 %v272
  %v408 = vunpack.c.l.b16 %v273
  %v409 = vunpack.c.l.b16 %v274
  %v410 = vunpack.c.l.b16 %v275
  %v411 = vunpack.c.l.b16 %v276
  %v412 = vunpack.c.l.b16 %v277
  %v413 = vunpack.c.l.b16 %v278
  %v414 = vunpack.c.l.b16 %v279
  %v415 = vunpack.c.l.b16 %v280
  %v416 = vunpack.c.l.b16 %v281
  %v417 = vunpack.c.l.b16 %v282
  %v418 = vunpack.c.l.b16 %v283
  %v419 = vunpack.c.l.b16 %v284
  %v420 = vunpack.c.l.b16 %v285
  %v421 = vunpack.c.l.b16 %v286
  %v422 = vunpack.c.l.b16 %v287
  %v423 = vunpack.c.l.b16 %v288
  %v424 = vunpack.c.l.b16 %v289
  %v425 = vunpack.c.l.b16 %v290
  %v426 = vunpack.c.l.b16 %v291
  %v427 = vunpack.c.l.b16 %v292
  %v428 = vunpack.c.l.b16 %v293
  %v429 = vunpack.c.l.b16 %v294
  %v430 = vunpack.c.l.b16 %v295
  %v431 = vunpack.c.l.b16 %v296
  %v432 = vunpack.c.l.b16 %v297
  %v433 = vunpack.c.l.b16 %v298
  %v434 = vunpack.c.l.b16 %v299
  %v435 = vunpack.c.l.b16 %v300
  %v436 = vunpack.c.l.b16 %v301
  %v437 = vunpack.c.l.b16 %v302
  %v438 = vunpack.c.l.b16 %v303
  %v439 = vunpack.c.l.b16 %v304
  %v440 = vunpack.c.l.b16 %v305
  %v441 = vunpack.c.l.b16 %v306
  %v442 = vunpack.c.l.b16 %v307
  %v443 = vpack.c.b16 %v380, %v379
  %v444 = vpack.c.b16 %v382, %v381
  %v445 = vpack.c.b16 %v384, %v383
  %v446 = vpack.c.b16 %v386, %v385
  %v447 = vpack.c.b16 %v388, %v387
  %v448 = vpack.c.b16 %v390, %v389
  %v449 = vpack.c.b16 %v392, %v391
  %v450 = vpack.c.b16 %v394, %v393
  %v451 = vpack.c.b16 %v396, %v395
  %v452 = vpack.c.b16 %v398, %v397
  %v453 = vpack.c.b16 %v400, %v399
  %v454 = vpack.c.b16 %v402, %v401
  %v455 = vpack.c.b16 %v404, %v403
  %v456 = vpack.c.b16 %v406, %v405
  %v457 = vpack.c.b16 %v408, %v407
  %v458 = vpack.c.b16 %v410, %v409
  %v459 = vpack.c.b16 %v412, %v411
  %v460 = vpack.c.b16 %v414, %v413
  %v461 = vpack.c.b16 %v416, %v415
  %v462 = vpack.c.b16 %v418, %v417
  %v463 = vpack.c.b16 %v420, %v419
  %v464 = vpack.c.b16 %v422, %v421
  %v465 = vpack.c.b16 %v424, %v423
  %v466 = vpack.c.b16 %v426, %v425
  %v467 = vpack.c.b16 %v428, %v427
  %v468 = vpack.c.b16 %v430, %v429
  %v469 = vpack.c.b16 %v432, %v431
  %v470 = vpack.c.b16 %v434, %v433
  %v471 = vpack.c.b16 %v436, %v435
  %v472 = vpack.c.b16 %v438, %v437
  %v473 = vpack.c.b16 %v440, %v439
  %v474 = vpack.c.b16 %v442, %v441
  %507 = vmatprep.subr.bf16.mxu0 0
  %508 = vmatpush1.bf16.msra.mxu0 %v443
  %509 = vmatprep.subr.bf16.mxu0 0
  %510 = vmatpush1.bf16.msra.mxu0 %v444
  %511 = vmatprep.subr.bf16.mxu0 0
  %512 = vmatpush1.bf16.msra.mxu0 %v445
  %513 = vmatprep.subr.bf16.mxu0 0
  %514 = vmatpush1.bf16.msra.mxu0 %v446
  %515 = vmatprep.subr.bf16.mxu0 0
  %516 = vmatpush1.bf16.msra.mxu0 %v447
  %517 = vmatprep.subr.bf16.mxu0 0
  %518 = vmatpush1.bf16.msra.mxu0 %v448
  %519 = vmatprep.subr.bf16.mxu0 0
  %520 = vmatpush1.bf16.msra.mxu0 %v449
  %521 = vmatprep.subr.bf16.mxu0 0
  %522 = vmatpush1.bf16.msra.mxu0 %v450
  %523 = vmatprep.subr.bf16.mxu0 0
  %524 = vmatpush1.bf16.msra.mxu0 %v451
  %525 = vmatprep.subr.bf16.mxu0 0
  %526 = vmatpush1.bf16.msra.mxu0 %v452
  %527 = vmatprep.subr.bf16.mxu0 0
  %528 = vmatpush1.bf16.msra.mxu0 %v453
  %529 = vmatprep.subr.bf16.mxu0 0
  %530 = vmatpush1.bf16.msra.mxu0 %v454
  %531 = vmatprep.subr.bf16.mxu0 0
  %532 = vmatpush1.bf16.msra.mxu0 %v455
  %533 = vmatprep.subr.bf16.mxu0 0
  %534 = vmatpush1.bf16.msra.mxu0 %v456
  %535 = vmatprep.subr.bf16.mxu0 0
  %536 = vmatpush1.bf16.msra.mxu0 %v457
  %537 = vmatprep.subr.bf16.mxu0 0
  %538 = vmatpush1.bf16.msra.mxu0 %v458
  %539 = vmatprep.mubr.bf16.mxu0 %v241
  %540 = vmatmul.mubr.bf16.gmra.mrb[0].mxu0 %v240
  %v541 = vpop.f32.mrb[0].mxu0
  %v542 = vadd.f32 %v313, %v541
  %v543 = vpop.f32.mrb[0].mxu0
  %v544 = vpop.f32.mrb[0].mxu0
  %v545 = vadd.f32 %v313, %v544
  %v546 = vpop.f32.mrb[0].mxu0
  %547 = vdwg.mxu0
  %548 = vmatprep.subr.bf16.mxu0 0
  %549 = vmatpush1.bf16.msra.mxu0 %v459
  %550 = vmatprep.subr.bf16.mxu0 0
  %551 = vmatpush1.bf16.msra.mxu0 %v460
  %552 = vmatprep.subr.bf16.mxu0 0
  %553 = vmatpush1.bf16.msra.mxu0 %v461
  %554 = vmatprep.subr.bf16.mxu0 0
  %555 = vmatpush1.bf16.msra.mxu0 %v462
  %556 = vmatprep.subr.bf16.mxu0 0
  %557 = vmatpush1.bf16.msra.mxu0 %v463
  %558 = vmatprep.subr.bf16.mxu0 0
  %559 = vmatpush1.bf16.msra.mxu0 %v464
  %560 = vmatprep.subr.bf16.mxu0 0
  %561 = vmatpush1.bf16.msra.mxu0 %v465
  %562 = vmatprep.subr.bf16.mxu0 0
  %563 = vmatpush1.bf16.msra.mxu0 %v466
  %564 = vmatprep.subr.bf16.mxu0 0
  %565 = vmatpush1.bf16.msra.mxu0 %v467
  %566 = vmatprep.subr.bf16.mxu0 0
  %567 = vmatpush1.bf16.msra.mxu0 %v468
  %568 = vmatprep.subr.bf16.mxu0 0
  %569 = vmatpush1.bf16.msra.mxu0 %v469
  %570 = vmatprep.subr.bf16.mxu0 0
  %571 = vmatpush1.bf16.msra.mxu0 %v470
  %572 = vmatprep.subr.bf16.mxu0 0
  %573 = vmatpush1.bf16.msra.mxu0 %v471
  %574 = vmatprep.subr.bf16.mxu0 0
  %575 = vmatpush1.bf16.msra.mxu0 %v472
  %576 = vmatprep.subr.bf16.mxu0 0
  %577 = vmatpush1.bf16.msra.mxu0 %v473
  %578 = vmatprep.subr.bf16.mxu0 0
  %579 = vmatpush1.bf16.msra.mxu0 %v474
  %580 = vmatprep.mubr.bf16.mxu0 %v243
  %581 = vmatmul.mubr.bf16.gmra.mrb[0].mxu0 %v242
  %v582 = vpop.f32.mrb[0].mxu0
  %v583 = vadd.f32 %v542, %v582
  %v584 = vpop.f32.mrb[0].mxu0
  %v585 = vpop.f32.mrb[0].mxu0
  %v586 = vadd.f32 %v545, %v585
  %v587 = vpop.f32.mrb[0].mxu0
  %588 = vdwg.mxu0
  %589 = vmax.xlane.f32.xlu0 %v583
  %v590 = vpop.xlane.xlu0 %589
  %591 = vmax.xlane.f32.xlu0 %v586
  %v592 = vpop.xlane.xlu0 %591
  %v593 = vsub.f32 %v583, %v590
  %v594 = vsub.f32 %v586, %v592
  %v595 = vmul.f32 %v593, 1.442695
  %v596 = vpow.pop %v595
  %v597 = vmul.f32 %v594, 1.442695
  %v598 = vpow.pop %v597
  %599 = vadd.xlane.f32.xlu0 %v596
  %v600 = vpop.xlane.xlu0 %599
  %601 = vadd.xlane.f32.xlu0 %v598
  %v602 = vpop.xlane.xlu0 %601
  %v603 = vrcp.pop %v600
  %v604 = vrcp.pop %v602
  %v605 = vmul.f32 %v596, %v603
  %v606 = vmul.f32 %v598, %v604
  %607 = vst [vmem:[%s5] sm:$0xff] %v605
  %608 = vst [vmem:[%s5 + $0x8] sm:$0xff] %v606
  // Predicated region
  $region22: #{seq2seq_head_pallas.1} parent=0 // pred_check
    _
  $region23: #{seq2seq_head_pallas.1} parent=0 // pred_check_branch
    %610 = sbr.rel (0) target = $region25
  $region24: #{seq2seq_head_pallas.1} parent=0 // pred_region
    _
  $region25: #{seq2seq_head_pallas.1} parent=0 // pred_fallthru
    _
  // Predicated region
  $region26: #{seq2seq_head_pallas.1} parent=0 // pred_check
    _
  $region27: #{seq2seq_head_pallas.1} parent=0 // pred_check_branch
    %612 = sbr.rel (0) target = $region29
  $region28: #{seq2seq_head_pallas.1} parent=0 // pred_region
    _
  $region29: #{seq2seq_head_pallas.1} parent=0 // pred_fallthru
    _

</llo_original>
